<compile_context>
chip_gen: v5e
topology: v5e:2x2
jax: 0.10.0
libtpu: 0.0.40
codegen_flags: <defaults>
</compile_context>

<pallas_src>
import jax
import jax.numpy as jnp
from jax.experimental import pallas as pl
from jax.experimental.pallas import tpu as pltpu


LANE = 128     # TPU lane width: keep all feature (last) dims lane-dense
SUBLANE = 8    # f32 sublane granularity for the batch (second-to-last) dim


def _round_up(n, m):
    return ((n + m - 1) // m) * m


def make_cencoder_kernel(num_linear):
    """Build a kernel computing: (Linear -> ReLU) x (num_linear-1) -> Linear."""

    def kernel(*refs):
        # refs = (x_ref, w0_ref, b0_ref, w1_ref, b1_ref, ..., o_ref)
        x_ref = refs[0]
        o_ref = refs[-1]
        h = x_ref[...]
        for i in range(num_linear):
            w = refs[1 + 2 * i][...]
            b = refs[2 + 2 * i][...]          # (1, N) row, broadcasts over batch tile
            h = jnp.dot(h, w, preferred_element_type=jnp.float32) + b
            if i < num_linear - 1:
                h = jnp.maximum(h, 0.0)       # ReLU between layers; none after final
        o_ref[...] = h.astype(o_ref.dtype)

    return kernel


def cencoder_forward(x, weights, biases, *, block_b=None):
    """Fused CEncoder forward.

    x: (B, n_in) f32
    weights[i]: (d_i, d_{i+1}) in (in, out) layout; biases[i]: (d_{i+1},)

    The batch is tiled over a 1-D "parallel" grid; all (zero-padded) weights stay
    VMEM-resident across grid steps. Zero-padding of feature dims is mathematically
    inert (padded cols/rows contribute exactly 0) and is sliced off at the end.
    """
    B, n_in = x.shape
    L = len(weights)
    dims = [n_in] + [w.shape[1] for w in weights]
    pdims = [_round_up(d, LANE) for d in dims]

    # Batch tile: fill the MXU M dim (128) when the batch is big enough.
    if block_b is None:
        block_b = 128 if B >= 128 else _round_up(B, SUBLANE)
    Bp = _round_up(B, block_b)

    # Zero-pad input, weights and biases to lane-dense / tile-aligned shapes.
    xp = jnp.pad(x.astype(jnp.float32), ((0, Bp - B), (0, pdims[0] - dims[0])))
    pw, pb = [], []
    for i, (w, b) in enumerate(zip(weights, biases)):
        pw.append(jnp.pad(w.astype(jnp.float32),
                          ((0, pdims[i] - dims[i]), (0, pdims[i + 1] - dims[i + 1]))))
        pb.append(jnp.pad(b.astype(jnp.float32).reshape(1, -1),
                          ((0, 0), (0, pdims[i + 1] - dims[i + 1]))))

    grid = (Bp // block_b,)

    in_specs = [pl.BlockSpec((block_b, pdims[0]), lambda g: (g, 0))]
    for i in range(L):
        in_specs.append(pl.BlockSpec(pw[i].shape, lambda g: (0, 0)))  # weight: VMEM-resident
        in_specs.append(pl.BlockSpec(pb[i].shape, lambda g: (0, 0)))  # bias row: VMEM-resident
    out_spec = pl.BlockSpec((block_b, pdims[-1]), lambda g: (g, 0))   # lane-dense output

    flops = 2 * Bp * sum(pdims[i] * pdims[i + 1] for i in range(L))
    bytes_accessed = 4 * (Bp * pdims[0] + Bp * pdims[-1]
                          + sum(w.size for w in pw) + sum(b.size for b in pb))

    out = pl.pallas_call(
        make_cencoder_kernel(L),
        out_shape=jax.ShapeDtypeStruct((Bp, pdims[-1]), jnp.float32),
        grid=grid,
        in_specs=in_specs,
        out_specs=out_spec,
        compiler_params=pltpu.CompilerParams(
            dimension_semantics=("parallel",),        # independent batch tiles (v7x dual-TC)
            vmem_limit_bytes=64 * 1024 * 1024,
        ),
        cost_estimate=pl.CostEstimate(
            flops=int(flops), transcendentals=0, bytes_accessed=int(bytes_accessed)),
    )(xp, *[a for wb in zip(pw, pb) for a in wb])

    return out[:B, :dims[-1]]


def init_params(key, n_in, n_layers, dim_hidden, dim_bn):
    """Deterministic synthetic params mirroring CEncoder.__init__.

    Weights: Xavier-uniform (as in the PyTorch module), stored as (in, out).
    Biases: PyTorch default Linear init U(-1/sqrt(fan_in), 1/sqrt(fan_in)).
    """
    dims = [n_in] + [dim_hidden] * n_layers + [dim_bn]
    weights, biases = [], []
    for i in range(len(dims) - 1):
        key, kw, kb = jax.random.split(key, 3)
        fan_in, fan_out = dims[i], dims[i + 1]
        limit = float(jnp.sqrt(6.0 / (fan_in + fan_out)))
        w = jax.random.uniform(kw, (fan_in, fan_out), jnp.float32, -limit, limit)
        bb = float(1.0 / jnp.sqrt(fan_in))
        b = jax.random.uniform(kb, (fan_out,), jnp.float32, -bb, bb)
        weights.append(w)
        biases.append(b)
    return weights, biases


def reference_forward(x, weights, biases):
    """Pure-JAX reference mirroring the PyTorch CEncoder.forward exactly."""
    h = x
    L = len(weights)
    for i in range(L):
        h = h @ weights[i] + biases[i]
        if i < L - 1:
            h = jax.nn.relu(h)
    return h


if __name__ == "__main__":
    key = jax.random.PRNGKey(0)
    k_x, k_p = jax.random.split(key)

    batch, n_in, n_layers, dim_hidden, dim_bn = 32, 32, 2, 64, 16
    x = jax.random.normal(k_x, (batch, n_in), jnp.float32)
    weights, biases = init_params(k_p, n_in, n_layers, dim_hidden, dim_bn)

    # block_b=16 -> grid=(2,) even at this toy batch, exercising the pipelined grid.
    y = cencoder_forward(x, weights, biases, block_b=16)
    y = jax.block_until_ready(y)

    y_ref = reference_forward(x, weights, biases)
    assert y.shape == (batch, dim_bn)
    assert jnp.allclose(y, y_ref, atol=1e-4, rtol=1e-4), "mismatch vs reference"

    print("KERNEL_OK")
</pallas_src>

<mosaic_0001>
module attributes {stable_mosaic.version = 11 : i64} {
  func.func @kernel(%arg0: i32, %arg1: memref<16x128xf32, #tpu.memory_space<vmem>>, %arg2: memref<128x128xf32, #tpu.memory_space<vmem>>, %arg3: memref<1x128xf32, #tpu.memory_space<vmem>>, %arg4: memref<128x128xf32, #tpu.memory_space<vmem>>, %arg5: memref<1x128xf32, #tpu.memory_space<vmem>>, %arg6: memref<128x128xf32, #tpu.memory_space<vmem>>, %arg7: memref<1x128xf32, #tpu.memory_space<vmem>>, %arg8: memref<16x128xf32, #tpu.memory_space<vmem>>) attributes {dimension_semantics = [#tpu.dimension_semantics<parallel>], iteration_bounds = array<i64: 2>, scalar_prefetch = 0 : i64, scratch_operands = 0 : i64, tpu.core_type = #tpu.core_type<tc>, window_params = [{transform_indices = @transform_0, window_bounds = array<i64: 16, 128>}, {pipeline_mode = #tpu.pipeline_mode<synchronous>, transform_indices = @transform_1, window_bounds = array<i64: 128, 128>}, {pipeline_mode = #tpu.pipeline_mode<synchronous>, transform_indices = @transform_2, window_bounds = array<i64: 1, 128>}, {pipeline_mode = #tpu.pipeline_mode<synchronous>, transform_indices = @transform_3, window_bounds = array<i64: 128, 128>}, {pipeline_mode = #tpu.pipeline_mode<synchronous>, transform_indices = @transform_4, window_bounds = array<i64: 1, 128>}, {pipeline_mode = #tpu.pipeline_mode<synchronous>, transform_indices = @transform_5, window_bounds = array<i64: 128, 128>}, {pipeline_mode = #tpu.pipeline_mode<synchronous>, transform_indices = @transform_6, window_bounds = array<i64: 1, 128>}, {transform_indices = @transform_7, window_bounds = array<i64: 16, 128>}]} {
    %c0 = arith.constant 0 : index
    %c0_0 = arith.constant 0 : index
    %0 = vector.load %arg1[%c0, %c0_0] : memref<16x128xf32, #tpu.memory_space<vmem>>, vector<16x128xf32>
    %c0_1 = arith.constant 0 : index
    %c0_2 = arith.constant 0 : index
    %1 = vector.load %arg2[%c0_1, %c0_2] : memref<128x128xf32, #tpu.memory_space<vmem>>, vector<128x128xf32>
    %c0_3 = arith.constant 0 : index
    %c0_4 = arith.constant 0 : index
    %2 = vector.load %arg3[%c0_3, %c0_4] : memref<1x128xf32, #tpu.memory_space<vmem>>, vector<1x128xf32>
    %cst = arith.constant dense<0.000000e+00> : vector<16x128xf32>
    %3 = tpu.matmul %0, %1, %cst {dimension_numbers = #tpu.dot_dimension_numbers<[1], [0], [0], [1], [0, 0, 1, 1], [], []>} : vector<16x128xf32>, vector<128x128xf32>, vector<16x128xf32> -> vector<16x128xf32>
    %4 = vector.broadcast %2 : vector<1x128xf32> to vector<16x128xf32>
    %5 = arith.addf %3, %4 : vector<16x128xf32>
    %cst_5 = arith.constant 0.000000e+00 : f32
    %6 = vector.broadcast %cst_5 : f32 to vector<16x128xf32>
    %7 = arith.maximumf %5, %6 : vector<16x128xf32>
    %c0_6 = arith.constant 0 : index
    %c0_7 = arith.constant 0 : index
    %8 = vector.load %arg4[%c0_6, %c0_7] : memref<128x128xf32, #tpu.memory_space<vmem>>, vector<128x128xf32>
    %c0_8 = arith.constant 0 : index
    %c0_9 = arith.constant 0 : index
    %9 = vector.load %arg5[%c0_8, %c0_9] : memref<1x128xf32, #tpu.memory_space<vmem>>, vector<1x128xf32>
    %cst_10 = arith.constant dense<0.000000e+00> : vector<16x128xf32>
    %10 = tpu.matmul %7, %8, %cst_10 {dimension_numbers = #tpu.dot_dimension_numbers<[1], [0], [0], [1], [0, 0, 1, 1], [], []>} : vector<16x128xf32>, vector<128x128xf32>, vector<16x128xf32> -> vector<16x128xf32>
    %11 = vector.broadcast %9 : vector<1x128xf32> to vector<16x128xf32>
    %12 = arith.addf %10, %11 : vector<16x128xf32>
    %cst_11 = arith.constant 0.000000e+00 : f32
    %13 = vector.broadcast %cst_11 : f32 to vector<16x128xf32>
    %14 = arith.maximumf %12, %13 : vector<16x128xf32>
    %c0_12 = arith.constant 0 : index
    %c0_13 = arith.constant 0 : index
    %15 = vector.load %arg6[%c0_12, %c0_13] : memref<128x128xf32, #tpu.memory_space<vmem>>, vector<128x128xf32>
    %c0_14 = arith.constant 0 : index
    %c0_15 = arith.constant 0 : index
    %16 = vector.load %arg7[%c0_14, %c0_15] : memref<1x128xf32, #tpu.memory_space<vmem>>, vector<1x128xf32>
    %cst_16 = arith.constant dense<0.000000e+00> : vector<16x128xf32>
    %17 = tpu.matmul %14, %15, %cst_16 {dimension_numbers = #tpu.dot_dimension_numbers<[1], [0], [0], [1], [0, 0, 1, 1], [], []>} : vector<16x128xf32>, vector<128x128xf32>, vector<16x128xf32> -> vector<16x128xf32>
    %18 = vector.broadcast %16 : vector<1x128xf32> to vector<16x128xf32>
    %19 = arith.addf %17, %18 : vector<16x128xf32>
    %c0_17 = arith.constant 0 : index
    %c0_18 = arith.constant 0 : index
    %20 = vector.load %arg8[%c0_17, %c0_18] : memref<16x128xf32, #tpu.memory_space<vmem>>, vector<16x128xf32>
    tpu.vector_store %arg8[%c0_17, %c0_18], %19 {strides = array<i32>} : memref<16x128xf32, #tpu.memory_space<vmem>>, vector<16x128xf32>,
    return
  }
  func.func @transform_0(%arg0: i32) -> (i32, i32) {
    %c0_i32 = arith.constant 0 : i32
    %c0_i32_0 = arith.constant 0 : i32
    return %arg0, %c0_i32 : i32, i32
  }
  func.func @transform_1(%arg0: i32) -> (i32, i32) {
    %c0_i32 = arith.constant 0 : i32
    %c0_i32_0 = arith.constant 0 : i32
    %c0_i32_1 = arith.constant 0 : i32
    return %c0_i32, %c0_i32_0 : i32, i32
  }
  func.func @transform_2(%arg0: i32) -> (i32, i32) {
    %c0_i32 = arith.constant 0 : i32
    %c0_i32_0 = arith.constant 0 : i32
    %c0_i32_1 = arith.constant 0 : i32
    return %c0_i32, %c0_i32_0 : i32, i32
  }
  func.func @transform_3(%arg0: i32) -> (i32, i32) {
    %c0_i32 = arith.constant 0 : i32
    %c0_i32_0 = arith.constant 0 : i32
    %c0_i32_1 = arith.constant 0 : i32
    return %c0_i32, %c0_i32_0 : i32, i32
  }
  func.func @transform_4(%arg0: i32) -> (i32, i32) {
    %c0_i32 = arith.constant 0 : i32
    %c0_i32_0 = arith.constant 0 : i32
    %c0_i32_1 = arith.constant 0 : i32
    return %c0_i32, %c0_i32_0 : i32, i32
  }
  func.func @transform_5(%arg0: i32) -> (i32, i32) {
    %c0_i32 = arith.constant 0 : i32
    %c0_i32_0 = arith.constant 0 : i32
    %c0_i32_1 = arith.constant 0 : i32
    return %c0_i32, %c0_i32_0 : i32, i32
  }
  func.func @transform_6(%arg0: i32) -> (i32, i32) {
    %c0_i32 = arith.constant 0 : i32
    %c0_i32_0 = arith.constant 0 : i32
    %c0_i32_1 = arith.constant 0 : i32
    return %c0_i32, %c0_i32_0 : i32, i32
  }
  func.func @transform_7(%arg0: i32) -> (i32, i32) {
    %c0_i32 = arith.constant 0 : i32
    %c0_i32_0 = arith.constant 0 : i32
    return %arg0, %c0_i32 : i32, i32
  }
}

</mosaic_0001>

<llo_original>
// kernel: tpu_custom_call.1
$region0: #{tpu_custom_call.1}
  #allocation0 [shape = 'u32[]', space=smem, size = 0x4, offset = 0x4, fixed_abs, tag = 'smem constant byte address 0x4 - core index']
  #allocation1 [shape = 'u32[72,128]{1,0:T(1,128)}', space=vmem, size = 0x9000, scoped, tag = 'internal scratch']
  %s0 = inlined_call_operand.hbm [shape: f32[32,128], index: 0, kind: input, shape index: {}]
  %s1 = inlined_call_operand.hbm [shape: f32[128,128], index: 1, kind: input, shape index: {}]
  %s2 = inlined_call_operand.vmem [shape: f32[1,128], index: 2, kind: input, shape index: {}]
  %s3 = inlined_call_operand.hbm [shape: f32[128,128], index: 3, kind: input, shape index: {}]
  %s4 = inlined_call_operand.vmem [shape: f32[1,128], index: 4, kind: input, shape index: {}]
  %s5 = inlined_call_operand.hbm [shape: f32[128,128], index: 5, kind: input, shape index: {}]
  %s6 = inlined_call_operand.vmem [shape: f32[1,128], index: 6, kind: input, shape index: {}]
  %s7 = inlined_call_operand.hbm [shape: f32[32,128], index: 7, kind: output, shape index: {}]
  %s8 = sld [smem:[#allocation0]]
  $region77: #{tpu_custom_call.1} parent=0
    _
  %s10 = ssub.s32 1, %s8
  %s11 = scalar_select 0, %s10, %s8
  $region1: #{tpu_custom_call.1} parent=0
    #allocation2 [shape = 'u8[16384]{0}', space=vmem, size = 0x4000, scoped, tag = 'input window, operand 0']
    #allocation3 [shape = 's32[2]{0}', space=sflag, size = 0x8, scoped, tag = 'scoped memory for tpu_custom_call.1']
    #allocation4 [shape = 's32[2]{0}', space=sflag, size = 0x8, scoped, tag = 'scoped memory for tpu_custom_call.1']
    #allocation5 [shape = 'u8[65536]{0}', space=vmem, size = 0x10000, scoped, tag = 'input window, operand 1, single buffered']
    #allocation6 [shape = 's32[1]{0}', space=sflag, size = 0x4, scoped, tag = 'scoped memory for tpu_custom_call.1']
    #allocation7 [shape = 'u8[65536]{0}', space=vmem, size = 0x10000, scoped, tag = 'input window, operand 3, single buffered']
    #allocation8 [shape = 'u8[65536]{0}', space=vmem, size = 0x10000, scoped, tag = 'input window, operand 5, single buffered']
    #allocation9 [shape = 's32[1]{0}', space=sflag, size = 0x4, scoped, tag = 'scoped memory for tpu_custom_call.1']
    #allocation10 [shape = 'u8[16384]{0}', space=vmem, size = 0x4000, scoped, tag = 'output window, operand 0']
    %12 = vsyncpa [#allocation3], 0
    %s13 = scalar_lea.sflag [#allocation3], 1
    %14 = vsyncpa %s13, 0
    %15 = vsyncpa [#allocation6], 0
    %16 = vsyncpa [#allocation9], 0
    %17 = vsyncpa [#allocation4], 0
    %s18 = scalar_lea.sflag [#allocation4], 1
    %19 = vsyncpa %s18, 0
    loop: start=0, step=1, limit=4
    $region2: #{tpu_custom_call.1} parent=1 // loop_pre_header
      _
    $region3: #{tpu_custom_call.1} parent=1 // loop_header
      %s21 = sphi 0, %s25
      %p22 = scmp.ge.s32.totalorder %s21, 4
      %s31 = sphi 0, %s33
      %s34 = sphi 0, %s31
      %s35 = sphi 0, %s34
      %s51 = sphi 0, %s35
      %s55 = sphi 0, %s55
      %s57 = sphi 0, %s55
      %s58 = sphi 0, %s57
      %s72 = sphi 0, %s58
      %s76 = sphi 0, %s76
      %s78 = sphi 0, %s76
      %s79 = sphi 0, %s78
      %s93 = sphi 0, %s79
      %s97 = sphi 0, %s97
      %s99 = sphi 0, %s97
      %s100 = sphi 0, %s99
      %s114 = sphi 0, %s100
      %s118 = sphi 0, %s118
      %s120 = sphi 0, %s118
      %s121 = sphi 0, %s120
      %s135 = sphi 0, %s121
      %s139 = sphi 0, %s139
      %s141 = sphi 0, %s139
      %s142 = sphi 0, %s141
      %s156 = sphi 0, %s142
      %s160 = sphi 0, %s160
      %s162 = sphi 0, %s160
      %s163 = sphi 0, %s162
      %s177 = sphi 0, %s163
      %s183 = sphi 0, %s185
      %s186 = sphi 0, %s183
      %s187 = sphi 0, %s186
      %s203 = sphi 0, %s187
    $region4: #{tpu_custom_call.1} parent=1 // loop_header_branch
      %24 = sbr.rel (%p22) target = $region8
    $region5: #{tpu_custom_call.1} parent=1 // loop_body
      %s26 = ssub.s32 %s21, 1
      %s27 = ssub.s32 %s21, 2
      %s28 = sadd.s32 %s21, 1
      %s29 = ssub.s32 %s21, %s28
      %p30 = scmp.eq.s32.totalorder %s29, 0
      %s32 = sadd.s32 %s31, 1
      %s33 = scalar_select %p30, %s31, %s32
      %p36 = pneg %p30
      %p37 = scmp.eq.s32.totalorder %s21, 1
      %p38 = por %p36, %p37
      %p39 = scmp.ne.s32.totalorder %s31, %s34
      %p40 = scmp.eq.s32.totalorder %s21, 0
      %p41 = por %p39, %p40
      %p42 = scmp.ne.s32.totalorder %s31, %s34
      %p43 = scmp.eq.s32.totalorder %s26, 1
      %p44 = por %p42, %p43
      %p45 = scmp.ne.s32.totalorder %s34, %s35
      %p46 = scmp.eq.s32.totalorder %s26, 0
      %p47 = por %p45, %p46
      %p48 = scmp.ne.s32.totalorder %s34, %s35
      %p49 = scmp.eq.s32.totalorder %s27, 1
      %p50 = por %p48, %p49
      %p52 = scmp.ne.s32.totalorder %s35, %s51
      %p53 = scmp.eq.s32.totalorder %s27, 0
      %p54 = por %p52, %p53
      %s56 = sadd.s32 %s55, 1
      %p59 = scmp.eq.s32.totalorder %s21, 1
      %p60 = scmp.ne.s32.totalorder %s55, %s57
      %p61 = scmp.eq.s32.totalorder %s21, 0
      %p62 = por %p60, %p61
      %p63 = scmp.ne.s32.totalorder %s55, %s57
      %p64 = scmp.eq.s32.totalorder %s26, 1
      %p65 = por %p63, %p64
      %p66 = scmp.ne.s32.totalorder %s57, %s58
      %p67 = scmp.eq.s32.totalorder %s26, 0
      %p68 = por %p66, %p67
      %p69 = scmp.ne.s32.totalorder %s57, %s58
      %p70 = scmp.eq.s32.totalorder %s27, 1
      %p71 = por %p69, %p70
      %p73 = scmp.ne.s32.totalorder %s58, %s72
      %p74 = scmp.eq.s32.totalorder %s27, 0
      %p75 = por %p73, %p74
      %s77 = sadd.s32 %s76, 1
      %p80 = scmp.eq.s32.totalorder %s21, 1
      %p81 = scmp.ne.s32.totalorder %s76, %s78
      %p82 = scmp.eq.s32.totalorder %s21, 0
      %p83 = por %p81, %p82
      %p84 = scmp.ne.s32.totalorder %s76, %s78
      %p85 = scmp.eq.s32.totalorder %s26, 1
      %p86 = por %p84, %p85
      %p87 = scmp.ne.s32.totalorder %s78, %s79
      %p88 = scmp.eq.s32.totalorder %s26, 0
      %p89 = por %p87, %p88
      %p90 = scmp.ne.s32.totalorder %s78, %s79
      %p91 = scmp.eq.s32.totalorder %s27, 1
      %p92 = por %p90, %p91
      %p94 = scmp.ne.s32.totalorder %s79, %s93
      %p95 = scmp.eq.s32.totalorder %s27, 0
      %p96 = por %p94, %p95
      %s98 = sadd.s32 %s97, 1
      %p101 = scmp.eq.s32.totalorder %s21, 1
      %p102 = scmp.ne.s32.totalorder %s97, %s99
      %p103 = scmp.eq.s32.totalorder %s21, 0
      %p104 = por %p102, %p103
      %p105 = scmp.ne.s32.totalorder %s97, %s99
      %p106 = scmp.eq.s32.totalorder %s26, 1
      %p107 = por %p105, %p106
      %p108 = scmp.ne.s32.totalorder %s99, %s100
      %p109 = scmp.eq.s32.totalorder %s26, 0
      %p110 = por %p108, %p109
      %p111 = scmp.ne.s32.totalorder %s99, %s100
      %p112 = scmp.eq.s32.totalorder %s27, 1
      %p113 = por %p111, %p112
      %p115 = scmp.ne.s32.totalorder %s100, %s114
      %p116 = scmp.eq.s32.totalorder %s27, 0
      %p117 = por %p115, %p116
      %s119 = sadd.s32 %s118, 1
      %p122 = scmp.eq.s32.totalorder %s21, 1
      %p123 = scmp.ne.s32.totalorder %s118, %s120
      %p124 = scmp.eq.s32.totalorder %s21, 0
      %p125 = por %p123, %p124
      %p126 = scmp.ne.s32.totalorder %s118, %s120
      %p127 = scmp.eq.s32.totalorder %s26, 1
      %p128 = por %p126, %p127
      %p129 = scmp.ne.s32.totalorder %s120, %s121
      %p130 = scmp.eq.s32.totalorder %s26, 0
      %p131 = por %p129, %p130
      %p132 = scmp.ne.s32.totalorder %s120, %s121
      %p133 = scmp.eq.s32.totalorder %s27, 1
      %p134 = por %p132, %p133
      %p136 = scmp.ne.s32.totalorder %s121, %s135
      %p137 = scmp.eq.s32.totalorder %s27, 0
      %p138 = por %p136, %p137
      %s140 = sadd.s32 %s139, 1
      %p143 = scmp.eq.s32.totalorder %s21, 1
      %p144 = scmp.ne.s32.totalorder %s139, %s141
      %p145 = scmp.eq.s32.totalorder %s21, 0
      %p146 = por %p144, %p145
      %p147 = scmp.ne.s32.totalorder %s139, %s141
      %p148 = scmp.eq.s32.totalorder %s26, 1
      %p149 = por %p147, %p148
      %p150 = scmp.ne.s32.totalorder %s141, %s142
      %p151 = scmp.eq.s32.totalorder %s26, 0
      %p152 = por %p150, %p151
      %p153 = scmp.ne.s32.totalorder %s141, %s142
      %p154 = scmp.eq.s32.totalorder %s27, 1
      %p155 = por %p153, %p154
      %p157 = scmp.ne.s32.totalorder %s142, %s156
      %p158 = scmp.eq.s32.totalorder %s27, 0
      %p159 = por %p157, %p158
      %s161 = sadd.s32 %s160, 1
      %p164 = scmp.eq.s32.totalorder %s21, 1
      %p165 = scmp.ne.s32.totalorder %s160, %s162
      %p166 = scmp.eq.s32.totalorder %s21, 0
      %p167 = por %p165, %p166
      %p168 = scmp.ne.s32.totalorder %s160, %s162
      %p169 = scmp.eq.s32.totalorder %s26, 1
      %p170 = por %p168, %p169
      %p171 = scmp.ne.s32.totalorder %s162, %s163
      %p172 = scmp.eq.s32.totalorder %s26, 0
      %p173 = por %p171, %p172
      %p174 = scmp.ne.s32.totalorder %s162, %s163
      %p175 = scmp.eq.s32.totalorder %s27, 1
      %p176 = por %p174, %p175
      %p178 = scmp.ne.s32.totalorder %s163, %s177
      %p179 = scmp.eq.s32.totalorder %s27, 0
      %p180 = por %p178, %p179
      %s181 = ssub.s32 %s21, %s28
      %p182 = scmp.eq.s32.totalorder %s181, 0
      %s184 = sadd.s32 %s183, 1
      %s185 = scalar_select %p182, %s183, %s184
      %p188 = pneg %p182
      %p189 = scmp.eq.s32.totalorder %s21, 1
      %p190 = por %p188, %p189
      %p191 = scmp.ne.s32.totalorder %s183, %s186
      %p192 = scmp.eq.s32.totalorder %s21, 0
      %p193 = por %p191, %p192
      %p194 = scmp.ne.s32.totalorder %s183, %s186
      %p195 = scmp.eq.s32.totalorder %s26, 1
      %p196 = por %p194, %p195
      %p197 = scmp.ne.s32.totalorder %s186, %s187
      %p198 = scmp.eq.s32.totalorder %s26, 0
      %p199 = por %p197, %p198
      %p200 = scmp.ne.s32.totalorder %s186, %s187
      %p201 = scmp.eq.s32.totalorder %s27, 1
      %p202 = por %p200, %p201
      %p204 = scmp.ne.s32.totalorder %s187, %s203
      %p205 = scmp.eq.s32.totalorder %s27, 0
      %p206 = por %p204, %p205
      %p207 = scmp.le.s32.totalorder 1, %s21
      %p208 = scmp.lt.s32.totalorder %s21, 3
      %p209 = pnand %p207, %p208
      %p210 = pneg %p209
      // Predicated region
      $region9: #{tpu_custom_call.1} parent=5 // pred_check
        _
      $region10: #{tpu_custom_call.1} parent=5 // pred_check_branch
        %212 = sbr.rel (%p209) target = $region12
      $region11: #{tpu_custom_call.1} parent=5 // pred_region
        %s213 = ssub.s32 %s21, 1
        // Predicated region
        $region13: #{tpu_custom_call.1} parent=11 // pred_check
          %p214 = pneg %p68
        $region14: #{tpu_custom_call.1} parent=11 // pred_check_branch
          %216 = sbr.rel (%p214) target = $region16
        $region15: #{tpu_custom_call.1} parent=11 // pred_region
          %218 = vsyncadd [#allocation6], 0
          %s219 = sshll.u32 %s1, 4
          %s220 = int_to_ptr.hbm [resolvable:$true] %s219
          %s221 = sshll.u32 [#allocation5], 4
          %s222 = int_to_ptr.vmem [resolvable:$true] %s221
          %227 = dma.hbm_to_vmem [thread:$0]  %s220, 2048, %s222, [#allocation6], 128, 128, 8
        $region16: #{tpu_custom_call.1} parent=11 // pred_fallthru
          _
        // Predicated region
        $region17: #{tpu_custom_call.1} parent=11 // pred_check
          %p228 = pneg %p89
        $region18: #{tpu_custom_call.1} parent=11 // pred_check_branch
          %230 = sbr.rel (%p228) target = $region20
        $region19: #{tpu_custom_call.1} parent=11 // pred_region
          _
        $region20: #{tpu_custom_call.1} parent=11 // pred_fallthru
          _
        // Predicated region
        $region21: #{tpu_custom_call.1} parent=11 // pred_check
          %p231 = pneg %p110
        $region22: #{tpu_custom_call.1} parent=11 // pred_check_branch
          %233 = sbr.rel (%p231) target = $region24
        $region23: #{tpu_custom_call.1} parent=11 // pred_region
          %235 = vsyncadd [#allocation6], 0
          %s236 = sshll.u32 %s3, 4
          %s237 = int_to_ptr.hbm [resolvable:$true] %s236
          %s238 = sshll.u32 [#allocation7], 4
          %s239 = int_to_ptr.vmem [resolvable:$true] %s238
          %244 = dma.hbm_to_vmem [thread:$0]  %s237, 2048, %s239, [#allocation6], 128, 128, 8
        $region24: #{tpu_custom_call.1} parent=11 // pred_fallthru
          _
        // Predicated region
        $region25: #{tpu_custom_call.1} parent=11 // pred_check
          %p245 = pneg %p131
        $region26: #{tpu_custom_call.1} parent=11 // pred_check_branch
          %247 = sbr.rel (%p245) target = $region28
        $region27: #{tpu_custom_call.1} parent=11 // pred_region
          _
        $region28: #{tpu_custom_call.1} parent=11 // pred_fallthru
          _
        // Predicated region
        $region29: #{tpu_custom_call.1} parent=11 // pred_check
          %p248 = pneg %p152
        $region30: #{tpu_custom_call.1} parent=11 // pred_check_branch
          %250 = sbr.rel (%p248) target = $region32
        $region31: #{tpu_custom_call.1} parent=11 // pred_region
          %252 = vsyncadd [#allocation9], 0
          %s253 = sshll.u32 %s5, 4
          %s254 = int_to_ptr.hbm [resolvable:$true] %s253
          %s255 = sshll.u32 [#allocation8], 4
          %s256 = int_to_ptr.vmem [resolvable:$true] %s255
          %261 = dma.hbm_to_vmem [thread:$0]  %s254, 2048, %s256, [#allocation9], 128, 128, 8
        $region32: #{tpu_custom_call.1} parent=11 // pred_fallthru
          _
        // Predicated region
        $region33: #{tpu_custom_call.1} parent=11 // pred_check
          %p262 = pneg %p173
        $region34: #{tpu_custom_call.1} parent=11 // pred_check_branch
          %264 = sbr.rel (%p262) target = $region36
        $region35: #{tpu_custom_call.1} parent=11 // pred_region
          _
        $region36: #{tpu_custom_call.1} parent=11 // pred_fallthru
          _
      $region12: #{tpu_custom_call.1} parent=5 // pred_fallthru
        _
      %p265 = scmp.lt.s32.totalorder %s21, 2
      // Predicated region
      $region37: #{tpu_custom_call.1} parent=5 // pred_check
        %p266 = pneg %p265
      $region38: #{tpu_custom_call.1} parent=5 // pred_check_branch
        %268 = sbr.rel (%p266) target = $region40
      $region39: #{tpu_custom_call.1} parent=5 // pred_region
        // Predicated region
        $region41: #{tpu_custom_call.1} parent=39 // pred_check
          %p269 = pneg %p41
        $region42: #{tpu_custom_call.1} parent=39 // pred_check_branch
          %271 = sbr.rel (%p269) target = $region44
        $region43: #{tpu_custom_call.1} parent=39 // pred_region
          %s272 = sand.u32 %s31, 1
          %s273 = scalar_lea.sflag [#allocation3], %s272
          %s274 = sand.u32 %s31, 1
          %s275 = smul.addr %s274, 16
          %s276 = scalar_lea.vmem [#allocation2], %s275
          %s277 = smul.u32 2, %s21
          %279 = vsyncadd %s273, 0
          %s280 = smul.addr %s277, 8
          %s281 = scalar_lea.hbm %s0, %s280
          %s282 = sshll.u32 %s281, 4
          %s283 = int_to_ptr.hbm [resolvable:$true] %s282
          %s284 = sshll.u32 %s276, 4
          %s285 = int_to_ptr.vmem [resolvable:$true] %s284
          %290 = dma.hbm_to_vmem [thread:$0]  %s283, 256, %s285, %s273, 128, 128, 8
        $region44: #{tpu_custom_call.1} parent=39 // pred_fallthru
          _
      $region40: #{tpu_custom_call.1} parent=5 // pred_fallthru
        _
      %p291 = scmp.le.s32.totalorder 1, %s21
      %p292 = scmp.lt.s32.totalorder %s21, 3
      %p293 = pnand %p291, %p292
      %p294 = pneg %p293
      // Predicated region
      $region45: #{tpu_custom_call.1} parent=5 // pred_check
        _
      $region46: #{tpu_custom_call.1} parent=5 // pred_check_branch
        %296 = sbr.rel (%p293) target = $region48
      $region47: #{tpu_custom_call.1} parent=5 // pred_region
        %s297 = ssub.s32 %s21, 1
        %s298 = sand.u32 %s34, 1
        %s299 = scalar_lea.sflag [#allocation3], %s298
        %s300 = sand.u32 %s34, 1
        %s301 = smul.addr %s300, 16
        %s302 = scalar_lea.vmem [#allocation2], %s301
        // Predicated region
        $region49: #{tpu_custom_call.1} parent=47 // pred_check
          %p303 = pneg %p47
        $region50: #{tpu_custom_call.1} parent=47 // pred_check_branch
          %305 = sbr.rel (%p303) target = $region52
        $region51: #{tpu_custom_call.1} parent=47 // pred_region
          %307 = dma.done %s299, 256
        $region52: #{tpu_custom_call.1} parent=47 // pred_fallthru
          _
        // Predicated region
        $region53: #{tpu_custom_call.1} parent=47 // pred_check
          %p308 = pneg %p68
        $region54: #{tpu_custom_call.1} parent=47 // pred_check_branch
          %310 = sbr.rel (%p308) target = $region56
        $region55: #{tpu_custom_call.1} parent=47 // pred_region
          %312 = dma.done [#allocation6], 2048
        $region56: #{tpu_custom_call.1} parent=47 // pred_fallthru
          _
        // Predicated region
        $region57: #{tpu_custom_call.1} parent=47 // pred_check
          %p313 = pneg %p110
        $region58: #{tpu_custom_call.1} parent=47 // pred_check_branch
          %315 = sbr.rel (%p313) target = $region60
        $region59: #{tpu_custom_call.1} parent=47 // pred_region
          %317 = dma.done [#allocation6], 2048
        $region60: #{tpu_custom_call.1} parent=47 // pred_fallthru
          _
        // Predicated region
        $region61: #{tpu_custom_call.1} parent=47 // pred_check
          %p318 = pneg %p152
        $region62: #{tpu_custom_call.1} parent=47 // pred_check_branch
          %320 = sbr.rel (%p318) target = $region64
        $region63: #{tpu_custom_call.1} parent=47 // pred_region
          %322 = dma.done [#allocation9], 2048
        $region64: #{tpu_custom_call.1} parent=47 // pred_fallthru
          _
        %s323 = sand.u32 %s34, 1
        %s324 = scalar_lea.sflag [#allocation3], %s323
        %s325 = sand.u32 %s34, 1
        %s326 = smul.addr %s325, 16
        %s327 = scalar_lea.vmem [#allocation2], %s326
        %p328 = pneg %p47
        %p329 = pneg %p44
        %p330 = pneg %p68
        %p331 = pneg %p65
        %p332 = pneg %p89
        %p333 = pneg %p86
        %p334 = pneg %p110
        %p335 = pneg %p107
        %p336 = pneg %p131
        %p337 = pneg %p128
        %p338 = pneg %p152
        %p339 = pneg %p149
        %p340 = pneg %p173
        %p341 = pneg %p170
        %p342 = pneg %p199
        %p343 = pneg %p196
        %s344 = sand.u32 %s186, 1
        %s345 = scalar_lea.sflag [#allocation4], %s344
        %s346 = sand.u32 %s186, 1
        %s347 = smul.addr %s346, 16
        %s348 = scalar_lea.vmem [#allocation10], %s347
        %s349 = smul.u32 2, %s26
        %s350 = smul.u32 2, %s26
        %v351 = vld [vmem:[%s302] sm:$0xff]
        %v352 = vld [vmem:[%s302 + $0x8] sm:$0xff]
        %v353 = vld [vmem:[#allocation5] sm:$0xff]
        %v354 = vld [vmem:[#allocation5 + $0x8] sm:$0xff]
        %v355 = vld [vmem:[#allocation5 + $0x10] sm:$0xff]
        %v356 = vld [vmem:[#allocation5 + $0x18] sm:$0xff]
        %v357 = vld [vmem:[#allocation5 + $0x20] sm:$0xff]
        %v358 = vld [vmem:[#allocation5 + $0x28] sm:$0xff]
        %v359 = vld [vmem:[#allocation5 + $0x30] sm:$0xff]
        %v360 = vld [vmem:[#allocation5 + $0x38] sm:$0xff]
        %v361 = vld [vmem:[#allocation5 + $0x40] sm:$0xff]
        %v362 = vld [vmem:[#allocation5 + $0x48] sm:$0xff]
        %v363 = vld [vmem:[#allocation5 + $0x50] sm:$0xff]
        %v364 = vld [vmem:[#allocation5 + $0x58] sm:$0xff]
        %v365 = vld [vmem:[#allocation5 + $0x60] sm:$0xff]
        %v366 = vld [vmem:[#allocation5 + $0x68] sm:$0xff]
        %v367 = vld [vmem:[#allocation5 + $0x70] sm:$0xff]
        %v368 = vld [vmem:[#allocation5 + $0x78] sm:$0xff]
        %v369 = vld [vmem:[%s2] sm:$0x1]
        %v371 = vperm.slane %v369, 0
        %373 = vmatpush.msra.mxu0 %v368
        %374 = vmatpush.msra.mxu0 %v367
        %375 = vmatpush.msra.mxu0 %v366
        %376 = vmatpush.msra.mxu0 %v365
        %377 = vmatpush.msra.mxu0 %v364
        %378 = vmatpush.msra.mxu0 %v363
        %379 = vmatpush.msra.mxu0 %v362
        %380 = vmatpush.msra.mxu0 %v361
        %381 = vmatpush.msra.mxu0 %v360
        %382 = vmatpush.msra.mxu0 %v359
        %383 = vmatpush.msra.mxu0 %v358
        %384 = vmatpush.msra.mxu0 %v357
        %385 = vmatpush.msra.mxu0 %v356
        %386 = vmatpush.msra.mxu0 %v355
        %387 = vmatpush.msra.mxu0 %v354
        %388 = vmatpush.msra.mxu0 %v353
        %389 = vmatmul.f32.gmra.mxu0 %v351
        %v390 = vpop.f32.mrf.mxu0
        %v391 = vadd.f32 %v371, %v390
        %392 = vmatmul.f32.gmra.mxu0 %v352
        %v393 = vpop.f32.mrf.mxu0
        %v394 = vadd.f32 %v371, %v393
        %395 = vdwg.mxu0
        %v396 = vmax.f32 %v391, 0.0
        %v397 = vmax.f32 %v394, 0.0
        %v398 = vld [vmem:[#allocation7] sm:$0xff]
        %v399 = vld [vmem:[#allocation7 + $0x8] sm:$0xff]
        %v400 = vld [vmem:[#allocation7 + $0x10] sm:$0xff]
        %v401 = vld [vmem:[#allocation7 + $0x18] sm:$0xff]
        %v402 = vld [vmem:[#allocation7 + $0x20] sm:$0xff]
        %v403 = vld [vmem:[#allocation7 + $0x28] sm:$0xff]
        %v404 = vld [vmem:[#allocation7 + $0x30] sm:$0xff]
        %v405 = vld [vmem:[#allocation7 + $0x38] sm:$0xff]
        %v406 = vld [vmem:[#allocation7 + $0x40] sm:$0xff]
        %v407 = vld [vmem:[#allocation7 + $0x48] sm:$0xff]
        %v408 = vld [vmem:[#allocation7 + $0x50] sm:$0xff]
        %v409 = vld [vmem:[#allocation7 + $0x58] sm:$0xff]
        %v410 = vld [vmem:[#allocation7 + $0x60] sm:$0xff]
        %v411 = vld [vmem:[#allocation7 + $0x68] sm:$0xff]
        %v412 = vld [vmem:[#allocation7 + $0x70] sm:$0xff]
        %v413 = vld [vmem:[#allocation7 + $0x78] sm:$0xff]
        %v414 = vld [vmem:[%s4] sm:$0x1]
        %v416 = vperm.slane %v414, 0
        %418 = vmatpush.msra.mxu0 %v413
        %419 = vmatpush.msra.mxu0 %v412
        %420 = vmatpush.msra.mxu0 %v411
        %421 = vmatpush.msra.mxu0 %v410
        %422 = vmatpush.msra.mxu0 %v409
        %423 = vmatpush.msra.mxu0 %v408
        %424 = vmatpush.msra.mxu0 %v407
        %425 = vmatpush.msra.mxu0 %v406
        %426 = vmatpush.msra.mxu0 %v405
        %427 = vmatpush.msra.mxu0 %v404
        %428 = vmatpush.msra.mxu0 %v403
        %429 = vmatpush.msra.mxu0 %v402
        %430 = vmatpush.msra.mxu0 %v401
        %431 = vmatpush.msra.mxu0 %v400
        %432 = vmatpush.msra.mxu0 %v399
        %433 = vmatpush.msra.mxu0 %v398
        %434 = vmatmul.f32.gmra.mxu0 %v396
        %v435 = vpop.f32.mrf.mxu0
        %v436 = vadd.f32 %v416, %v435
        %437 = vmatmul.f32.gmra.mxu0 %v397
        %v438 = vpop.f32.mrf.mxu0
        %v439 = vadd.f32 %v416, %v438
        %440 = vdwg.mxu0
        %v441 = vmax.f32 %v436, 0.0
        %v442 = vmax.f32 %v439, 0.0
        %v443 = vld [vmem:[#allocation8] sm:$0xff]
        %v444 = vld [vmem:[#allocation8 + $0x8] sm:$0xff]
        %v445 = vld [vmem:[#allocation8 + $0x10] sm:$0xff]
        %v446 = vld [vmem:[#allocation8 + $0x18] sm:$0xff]
        %v447 = vld [vmem:[#allocation8 + $0x20] sm:$0xff]
        %v448 = vld [vmem:[#allocation8 + $0x28] sm:$0xff]
        %v449 = vld [vmem:[#allocation8 + $0x30] sm:$0xff]
        %v450 = vld [vmem:[#allocation8 + $0x38] sm:$0xff]
        %v451 = vld [vmem:[#allocation8 + $0x40] sm:$0xff]
        %v452 = vld [vmem:[#allocation8 + $0x48] sm:$0xff]
        %v453 = vld [vmem:[#allocation8 + $0x50] sm:$0xff]
        %v454 = vld [vmem:[#allocation8 + $0x58] sm:$0xff]
        %v455 = vld [vmem:[#allocation8 + $0x60] sm:$0xff]
        %v456 = vld [vmem:[#allocation8 + $0x68] sm:$0xff]
        %v457 = vld [vmem:[#allocation8 + $0x70] sm:$0xff]
        %v458 = vld [vmem:[#allocation8 + $0x78] sm:$0xff]
        %v459 = vld [vmem:[%s6] sm:$0x1]
        %v461 = vperm.slane %v459, 0
        %463 = vmatpush.msra.mxu0 %v458
        %464 = vmatpush.msra.mxu0 %v457
        %465 = vmatpush.msra.mxu0 %v456
        %466 = vmatpush.msra.mxu0 %v455
        %467 = vmatpush.msra.mxu0 %v454
        %468 = vmatpush.msra.mxu0 %v453
        %469 = vmatpush.msra.mxu0 %v452
        %470 = vmatpush.msra.mxu0 %v451
        %471 = vmatpush.msra.mxu0 %v450
        %472 = vmatpush.msra.mxu0 %v449
        %473 = vmatpush.msra.mxu0 %v448
        %474 = vmatpush.msra.mxu0 %v447
        %475 = vmatpush.msra.mxu0 %v446
        %476 = vmatpush.msra.mxu0 %v445
        %477 = vmatpush.msra.mxu0 %v444
        %478 = vmatpush.msra.mxu0 %v443
        %479 = vmatmul.f32.gmra.mxu0 %v441
        %v480 = vpop.f32.mrf.mxu0
        %v481 = vadd.f32 %v461, %v480
        %482 = vmatmul.f32.gmra.mxu0 %v442
        %v483 = vpop.f32.mrf.mxu0
        %v484 = vadd.f32 %v461, %v483
        %485 = vdwg.mxu0
        %486 = vst [vmem:[%s348] sm:$0xff] %v481
        %487 = vst [vmem:[%s348 + $0x8] sm:$0xff] %v484
        %s488 = sand.u32 %s186, 1
        %s489 = scalar_lea.sflag [#allocation4], %s488
        %s490 = sand.u32 %s186, 1
        %s491 = smul.addr %s490, 16
        %s492 = scalar_lea.vmem [#allocation10], %s491
        // Predicated region
        $region65: #{tpu_custom_call.1} parent=47 // pred_check
          %p493 = pneg %p196
        $region66: #{tpu_custom_call.1} parent=47 // pred_check_branch
          %495 = sbr.rel (%p493) target = $region68
        $region67: #{tpu_custom_call.1} parent=47 // pred_region
          %s496 = smul.u32 2, %s26
          %498 = vsyncadd %s489, 0
          %s499 = smul.addr %s496, 8
          %s500 = scalar_lea.hbm %s7, %s499
          %s501 = sshll.u32 %s492, 4
          %s502 = int_to_ptr.vmem [resolvable:$true] %s501
          %s503 = sshll.u32 %s500, 4
          %s504 = int_to_ptr.hbm [resolvable:$true] %s503
          %509 = dma.vmem_to_hbm [thread:$0]  %s502, 256, %s504, %s489, 128, 128, 8
        $region68: #{tpu_custom_call.1} parent=47 // pred_fallthru
          _
      $region48: #{tpu_custom_call.1} parent=5 // pred_fallthru
        _
      %p510 = scmp.le.s32.totalorder 2, %s21
      // Predicated region
      $region69: #{tpu_custom_call.1} parent=5 // pred_check
        %p511 = pneg %p510
      $region70: #{tpu_custom_call.1} parent=5 // pred_check_branch
        %513 = sbr.rel (%p511) target = $region72
      $region71: #{tpu_custom_call.1} parent=5 // pred_region
        %s514 = ssub.s32 %s21, 2
        // Predicated region
        $region73: #{tpu_custom_call.1} parent=71 // pred_check
          %p515 = pneg %p202
        $region74: #{tpu_custom_call.1} parent=71 // pred_check_branch
          %517 = sbr.rel (%p515) target = $region76
        $region75: #{tpu_custom_call.1} parent=71 // pred_region
          %s518 = sand.u32 %s187, 1
          %s519 = scalar_lea.sflag [#allocation4], %s518
          %s520 = sand.u32 %s187, 1
          %s521 = smul.addr %s520, 16
          %s522 = scalar_lea.vmem [#allocation10], %s521
          %524 = dma.done %s519, 256
        $region76: #{tpu_custom_call.1} parent=71 // pred_fallthru
          _
      $region72: #{tpu_custom_call.1} parent=5 // pred_fallthru
        _
    $region6: #{tpu_custom_call.1} parent=1 // loop_footer
      %s25 = sadd.s32 1, %s21
    $region7: #{tpu_custom_call.1} parent=1 // loop_footer_branch
      %20 = sbr.rel target = $region3
    $region8: #{tpu_custom_call.1} parent=1 // loop_exit
      _
    %525 = vsyncpa [#allocation3], 1
    %s526 = scalar_lea.sflag [#allocation3], 1
    %527 = vsyncpa %s526, 1
    %528 = vsyncpa [#allocation6], 1
    %529 = vsyncpa [#allocation9], 1
    %530 = vsyncpa [#allocation4], 1
    %s531 = scalar_lea.sflag [#allocation4], 1
    %532 = vsyncpa %s531, 1

</llo_original>
